<compile_context>
chip_gen: v7x
topology: tpu7x:2x2x1
jax: 0.10.0
libtpu: 0.0.40
codegen_flags: <defaults>
</compile_context>

<pallas_src>
import functools
import math

import jax
import jax.numpy as jnp
from jax.experimental import pallas as pl
from jax.experimental.pallas import tpu as pltpu


def _fake_quant_kernel(scale_ref, x_ref, o_ref, *, level_low, level_high):
    # scale_ref: (1,) f32 in SMEM; x_ref/o_ref: (block_rows, cols) native dtype in VMEM.
    # NNCF clamps scale away from zero; mirror that with a tiny eps.
    scale = jnp.maximum(scale_ref[0], jnp.float32(1e-16))
    step = scale / level_high            # scalar (scalar unit, once per grid step)
    inv_step = level_high / scale        # scalar reciprocal -> vector mul, not divide
    x = x_ref[...].astype(jnp.float32)   # cast in vregs, not in the wrapper
    q = jnp.clip(jnp.round(x * inv_step), level_low, level_high)
    o_ref[...] = (q * step).astype(o_ref.dtype)


def base_quantizer_forward(x, scale, *, bits=8, signed=True, init_stage=False):
    """Pallas implementation of BaseQuantizer.forward (symmetric fake-quant)."""
    if init_stage:
        # forward() short-circuits to identity during the init stage.
        return x

    levels = 2 ** bits
    if signed:
        level_high = float(levels // 2 - 1)      # 127 for 8 bit
        level_low = float(-(levels // 2))        # -128 for 8 bit
    else:
        level_high = float(levels - 1)
        level_low = 0.0

    orig_shape = x.shape
    dtype = x.dtype
    itemsize = jnp.dtype(dtype).itemsize
    n = math.prod(orig_shape)

    # ---- choose a lane-dense 2-D slab (rows, cols), cols a multiple of 128 ----
    cols = next((c for c in (1024, 512, 256, 128) if n % c == 0), None)
    pad_elems = 0
    if cols is None:
        # TODO(synk): element counts not divisible by 128 take a padded fallback
        # (one extra partial row of HBM traffic); common NN activation shapes
        # never hit this path.
        cols = 128
        rows = -(-n // cols)
        pad_elems = rows * cols - n
    else:
        rows = n // cols

    # ---- pick block_rows: ~2 MiB per tile, respecting sublane packing ----
    sub = {1: 32, 2: 16, 4: 8}.get(itemsize, 8)          # min sublane multiple per dtype
    target = max(sub, (2 * 1024 * 1024) // (cols * itemsize))
    if rows <= target:
        block_rows = rows                                 # full-dim block (exempt from 8-row rule)
    else:
        block_rows = None
        for d in range(min(target, rows), sub - 1, -1):   # largest even divisor <= target
            if rows % d == 0 and d % sub == 0:
                block_rows = d
                break
        if block_rows is None:
            # No clean divisor: pad rows up to a multiple of a fixed block size.
            block_rows = max(sub, (target // sub) * sub)
            rows_p = -(-rows // block_rows) * block_rows
            pad_elems += (rows_p - rows) * cols
            rows = rows_p

    xf = x.reshape(-1)
    if pad_elems:
        xf = jnp.pad(xf, (0, pad_elems))
    x2 = xf.reshape(rows, cols)

    scale_arr = jnp.asarray([scale], dtype=jnp.float32)

    kernel = functools.partial(
        _fake_quant_kernel, level_low=level_low, level_high=level_high
    )

    out2 = pl.pallas_call(
        kernel,
        out_shape=jax.ShapeDtypeStruct((rows, cols), dtype),
        grid=(rows // block_rows,),
        in_specs=[
            pl.BlockSpec(memory_space=pltpu.MemorySpace.SMEM),        # scale scalar
            pl.BlockSpec((block_rows, cols), lambda i: (i, 0)),       # x tile
        ],
        out_specs=pl.BlockSpec((block_rows, cols), lambda i: (i, 0)),
        compiler_params=pltpu.CompilerParams(
            dimension_semantics=("parallel",),                        # shards across v7x TCs
        ),
    )(scale_arr, x2)

    out = out2.reshape(-1)
    if pad_elems:
        out = out[:n]
    return out.reshape(orig_shape)


def _reference(x, scale, *, bits=8, signed=True):
    levels = 2 ** bits
    level_high = float(levels // 2 - 1) if signed else float(levels - 1)
    level_low = float(-(levels // 2)) if signed else 0.0
    step = scale / level_high
    xf = x.astype(jnp.float32)
    return (jnp.clip(jnp.round(xf / step), level_low, level_high) * step).astype(x.dtype)


if __name__ == "__main__":
    key = jax.random.PRNGKey(0)

    # NCHW activation, as a PyTorch conv would feed the quantizer (small shape).
    x = jax.random.normal(key, (2, 4, 16, 16), dtype=jnp.float32)
    scale = 1.0

    # init_stage=True path: identity.
    y_init = base_quantizer_forward(x, scale, init_stage=True)
    assert y_init.shape == x.shape

    # init_stage=False path: fake-quantize via the Pallas kernel.
    y = jax.block_until_ready(base_quantizer_forward(x, scale, init_stage=False))
    y_ref = _reference(x, scale)
    assert y.shape == x.shape and y.dtype == x.dtype
    assert jnp.allclose(y, y_ref, atol=1e-6), "mismatch vs reference fake-quant (small)"

    # Larger activation to exercise the multi-step, large-tile grid path.
    xb = jax.random.normal(jax.random.PRNGKey(1), (16, 128, 32, 32), dtype=jnp.float32)
    yb = jax.block_until_ready(base_quantizer_forward(xb, 0.75, init_stage=False))
    yb_ref = _reference(xb, 0.75)
    assert jnp.allclose(yb, yb_ref, atol=1e-6), "mismatch vs reference fake-quant (large)"

    print("KERNEL_OK")
</pallas_src>

<mosaic_0001>
module attributes {stable_mosaic.version = 11 : i64} {
  func.func @_fake_quant_kernel(%arg0: i32, %arg1: memref<1xf32, #tpu.memory_space<smem>>, %arg2: memref<2x1024xf32, #tpu.memory_space<vmem>>, %arg3: memref<2x1024xf32, #tpu.memory_space<vmem>>) attributes {dimension_semantics = [#tpu.dimension_semantics<parallel>], iteration_bounds = array<i64: 1>, scalar_prefetch = 0 : i64, scratch_operands = 0 : i64, tpu.core_type = #tpu.core_type<tc>, window_params = [{transform_indices = @transform_0, window_bounds = array<i64: 1>}, {transform_indices = @transform_1, window_bounds = array<i64: 2, 1024>}, {transform_indices = @transform_2, window_bounds = array<i64: 2, 1024>}]} {
    %c0 = arith.constant 0 : index
    %0 = memref.load %arg1[%c0] : memref<1xf32, #tpu.memory_space<smem>>
    %cst = arith.constant 1.000000e-16 : f32
    %1 = arith.maximumf %0, %cst : f32
    %cst_0 = arith.constant 1.270000e+02 : f32
    %2 = arith.divf %1, %cst_0 : f32
    %cst_1 = arith.constant 1.270000e+02 : f32
    %3 = arith.divf %cst_1, %1 : f32
    %c0_2 = arith.constant 0 : index
    %c0_3 = arith.constant 0 : index
    %4 = vector.load %arg2[%c0_2, %c0_3] : memref<2x1024xf32, #tpu.memory_space<vmem>>, vector<2x1024xf32>
    %5 = vector.broadcast %3 : f32 to vector<2x1024xf32>
    %6 = arith.mulf %4, %5 : vector<2x1024xf32>
    %7 = math.roundeven %6 : vector<2x1024xf32>
    %cst_4 = arith.constant -1.280000e+02 : f32
    %cst_5 = arith.constant 1.270000e+02 : f32
    %8 = vector.broadcast %cst_4 : f32 to vector<2x1024xf32>
    %9 = arith.maximumf %8, %7 : vector<2x1024xf32>
    %10 = vector.broadcast %cst_5 : f32 to vector<2x1024xf32>
    %11 = arith.minimumf %10, %9 : vector<2x1024xf32>
    %12 = vector.broadcast %2 : f32 to vector<2x1024xf32>
    %13 = arith.mulf %11, %12 : vector<2x1024xf32>
    %c0_6 = arith.constant 0 : index
    %c0_7 = arith.constant 0 : index
    %14 = vector.load %arg3[%c0_6, %c0_7] : memref<2x1024xf32, #tpu.memory_space<vmem>>, vector<2x1024xf32>
    tpu.vector_store %arg3[%c0_6, %c0_7], %13 {strides = array<i32>} : memref<2x1024xf32, #tpu.memory_space<vmem>>, vector<2x1024xf32>,
    return
  }
  func.func @transform_0(%arg0: i32) -> i32 {
    %c0_i32 = arith.constant 0 : i32
    %c0_i32_0 = arith.constant 0 : i32
    return %c0_i32 : i32
  }
  func.func @transform_1(%arg0: i32) -> (i32, i32) {
    %c0_i32 = arith.constant 0 : i32
    %c0_i32_0 = arith.constant 0 : i32
    return %arg0, %c0_i32 : i32, i32
  }
  func.func @transform_2(%arg0: i32) -> (i32, i32) {
    %c0_i32 = arith.constant 0 : i32
    %c0_i32_0 = arith.constant 0 : i32
    return %arg0, %c0_i32 : i32, i32
  }
}

</mosaic_0001>

<llo_original>
// kernel: tpu_custom_call.1
$region0: #{tpu_custom_call.1}
  #allocation0 [shape = 'u32[]', space=smem, size = 0x4, offset = 0x4, fixed_abs, tag = 'smem constant byte address 0x4 - core index']
  #allocation1 [shape = 'u32[144,128]{1,0:T(1,128)}', space=vmem, size = 0x12000, scoped, tag = 'internal scratch']
  #allocation2 [shape = 'f32[1]{0:T(128)S(6)}', space=smem, size = 0x200, scoped, tag = 'scoped memory for tpu_custom_call.1']
  %s0 = inlined_call_operand.<no memory space> [shape: f32[1], index: 0, kind: input, shape index: {}]
  %s1 = inlined_call_operand.hbm [shape: f32[2,1024], index: 1, kind: input, shape index: {}]
  %s2 = inlined_call_operand.hbm [shape: f32[2,1024], index: 2, kind: output, shape index: {}]
  %s3 = sld [smem:[#allocation0]]
  $region22: #{tpu_custom_call.1} parent=0
    _
  %s5 = ssub.s32 1, %s3
  %s6 = scalar_select 0, %s5, %s3
  %7 = sst [smem:[#allocation2]] %s0
  $region1: #{tpu_custom_call.1} parent=0
    #allocation3 [shape = 'u8[8192]{0}', space=vmem, size = 0x2000, scoped, tag = 'input window, operand 1, single buffered']
    #allocation4 [shape = 's32[1]{0}', space=sflag, size = 0x4, scoped, tag = 'scoped memory for tpu_custom_call.1']
    #allocation5 [shape = 's32[1]{0}', space=sflag, size = 0x4, scoped, tag = 'scoped memory for tpu_custom_call.1']
    #allocation6 [shape = 'u8[8192]{0}', space=vmem, size = 0x2000, scoped, tag = 'output window, operand 0, single buffered']
    %8 = vsyncpa [#allocation4], 0
    %9 = vsyncpa [#allocation5], 0
    // Predicated region
    $region2: #{tpu_custom_call.1} parent=1 // pred_check
      _
    $region3: #{tpu_custom_call.1} parent=1 // pred_check_branch
      %11 = sbr.rel (0) target = $region5
    $region4: #{tpu_custom_call.1} parent=1 // pred_region
      _
    $region5: #{tpu_custom_call.1} parent=1 // pred_fallthru
      _
    // Predicated region
    $region6: #{tpu_custom_call.1} parent=1 // pred_check
      _
    $region7: #{tpu_custom_call.1} parent=1 // pred_check_branch
      %13 = sbr.rel (0) target = $region9
    $region8: #{tpu_custom_call.1} parent=1 // pred_region
      %s15 = ssub.s32 256, 256
      %16 = vsyncadd [#allocation4], %s15
      %s18 = sshll.u32 [#allocation3], 4
      %s19 = int_to_ptr.vmem [resolvable:$true] %s18
      %21 = dma.hbm_to_vmem [thread:$0]  %s1, 256, %s19, [#allocation4]
    $region9: #{tpu_custom_call.1} parent=1 // pred_fallthru
      _
    // Predicated region
    $region10: #{tpu_custom_call.1} parent=1 // pred_check
      _
    $region11: #{tpu_custom_call.1} parent=1 // pred_check_branch
      %23 = sbr.rel (0) target = $region13
    $region12: #{tpu_custom_call.1} parent=1 // pred_region
      %24 = dma.done [#allocation4], 256
    $region13: #{tpu_custom_call.1} parent=1 // pred_fallthru
      _
    %s25 = sld [smem:[#allocation2]]
    %s26 = smax.f32 %s25, 1e-16
    %v27 = vrcp.pop 127.0
    %s28 = vtos %v27
    %s29 = smul.f32 %s26, %s28
    %v30 = vstv %s26
    %v31 = vrcp.pop %v30
    %s32 = vtos %v31
    %s33 = smul.f32 127.0, %s32
    %v34 = vld [vmem:[#allocation3] sm:$0xff]
    %v35 = vld [vmem:[#allocation3 + $0x8] sm:$0xff]
    %v36 = vstv %s33
    %v37 = vmul.f32 %v34, %v36
    %v38 = vmul.f32 %v35, %v36
    %v39 = vround.ne.pseudo %v37
    %v40 = vround.ne.pseudo %v38
    %v41 = vmax.f32 %v39, -128.0
    %v42 = vmax.f32 %v40, -128.0
    %v43 = vmin.f32 %v41, 127.0
    %v44 = vmin.f32 %v42, 127.0
    %v45 = vstv %s29
    %v46 = vmul.f32 %v43, %v45
    %v47 = vmul.f32 %v44, %v45
    %48 = vst [vmem:[#allocation6] sm:$0xff] %v46
    %49 = vst [vmem:[#allocation6 + $0x8] sm:$0xff] %v47
    // Predicated region
    $region14: #{tpu_custom_call.1} parent=1 // pred_check
      _
    $region15: #{tpu_custom_call.1} parent=1 // pred_check_branch
      %51 = sbr.rel (0) target = $region17
    $region16: #{tpu_custom_call.1} parent=1 // pred_region
      %s53 = ssub.s32 256, 256
      %54 = vsyncadd [#allocation5], %s53
      %s56 = sshll.u32 [#allocation6], 4
      %s57 = int_to_ptr.vmem [resolvable:$true] %s56
      %59 = dma.vmem_to_hbm [thread:$0]  %s57, 256, %s2, [#allocation5]
    $region17: #{tpu_custom_call.1} parent=1 // pred_fallthru
      _
    // Predicated region
    $region18: #{tpu_custom_call.1} parent=1 // pred_check
      _
    $region19: #{tpu_custom_call.1} parent=1 // pred_check_branch
      %61 = sbr.rel (0) target = $region21
    $region20: #{tpu_custom_call.1} parent=1 // pred_region
      %62 = dma.done [#allocation5], 256
    $region21: #{tpu_custom_call.1} parent=1 // pred_fallthru
      _
    %63 = vsyncpa [#allocation4], 1
    %64 = vsyncpa [#allocation5], 1

</llo_original>
